<compile_context>
chip_gen: v6e
topology: v6e:2x2x1
jax: 0.10.0
libtpu: 0.0.40
codegen_flags: <defaults>
</compile_context>

<pallas_src>
import math
from functools import partial

import jax
import jax.numpy as jnp
from jax.experimental import pallas as pl
from jax.experimental.pallas import tpu as pltpu


# ------------------------------ tiling helper ------------------------------

def _tile(dim, pref):
    """Largest tile <= pref that divides dim (pref is a power of two)."""
    t = min(dim, pref)
    while dim % t:
        t //= 2
    return t


# --------------------------- tiled linear kernels ---------------------------

def _linear_kernel(x_ref, w_ref, o_ref, acc_ref):
    k = pl.program_id(2)

    @pl.when(k == 0)
    def _():
        acc_ref[...] = jnp.zeros_like(acc_ref)

    acc_ref[...] += jnp.dot(x_ref[...].astype(jnp.bfloat16), w_ref[...],
                            preferred_element_type=jnp.float32)

    @pl.when(k == pl.num_programs(2) - 1)
    def _():
        o_ref[...] = acc_ref[...].astype(o_ref.dtype)


def _linear_res_kernel(x_ref, w_ref, r_ref, o_ref, acc_ref):
    k = pl.program_id(2)

    @pl.when(k == 0)
    def _():
        acc_ref[...] = jnp.zeros_like(acc_ref)

    acc_ref[...] += jnp.dot(x_ref[...].astype(jnp.bfloat16), w_ref[...],
                            preferred_element_type=jnp.float32)

    @pl.when(k == pl.num_programs(2) - 1)
    def _():
        # Fused residual add (saves one full HBM round trip of the activations).
        o_ref[...] = (acc_ref[...] + r_ref[...].astype(jnp.float32)).astype(o_ref.dtype)


def pallas_linear(x, w, residual=None, *, bm=256, bn=512, bk=512):
    """y = x @ w (+ residual).  x: [M,K] f32, w: [K,N] bf16 (pre-transposed nn.Linear)."""
    M, K = x.shape
    N = w.shape[1]
    tm, tn, tk = _tile(M, bm), _tile(N, bn), _tile(K, bk)
    grid = (M // tm, N // tn, K // tk)
    x_spec = pl.BlockSpec((tm, tk), lambda i, j, k: (i, k))
    w_spec = pl.BlockSpec((tk, tn), lambda i, j, k: (k, j))
    o_spec = pl.BlockSpec((tm, tn), lambda i, j, k: (i, j))
    scratch = [pltpu.VMEM((tm, tn), jnp.float32)]
    cp = pltpu.CompilerParams(
        dimension_semantics=("parallel", "parallel", "arbitrary"))
    if residual is None:
        return pl.pallas_call(
            _linear_kernel,
            out_shape=jax.ShapeDtypeStruct((M, N), jnp.float32),
            grid=grid, in_specs=[x_spec, w_spec], out_specs=o_spec,
            scratch_shapes=scratch, compiler_params=cp,
        )(x, w)
    r_spec = pl.BlockSpec((tm, tn), lambda i, j, k: (i, j))
    return pl.pallas_call(
        _linear_res_kernel,
        out_shape=jax.ShapeDtypeStruct((M, N), jnp.float32),
        grid=grid, in_specs=[x_spec, w_spec, r_spec], out_specs=o_spec,
        scratch_shapes=scratch, compiler_params=cp,
    )(x, w, residual)


# -------------------------------- RMSNorm ----------------------------------

def _rmsnorm_kernel(x_ref, w_ref, o_ref, *, eps):
    x = x_ref[...].astype(jnp.float32)
    var = jnp.mean(x * x, axis=-1, keepdims=True)
    o_ref[...] = (x * jax.lax.rsqrt(var + eps) * w_ref[...]).astype(o_ref.dtype)


def pallas_rmsnorm(x, w, eps, *, bm=256):
    M, H = x.shape
    tm = _tile(M, bm)
    return pl.pallas_call(
        partial(_rmsnorm_kernel, eps=eps),
        out_shape=jax.ShapeDtypeStruct((M, H), x.dtype),
        grid=(M // tm,),
        in_specs=[pl.BlockSpec((tm, H), lambda i: (i, 0)),
                  pl.BlockSpec((1, H), lambda i: (0, 0))],
        out_specs=pl.BlockSpec((tm, H), lambda i: (i, 0)),
        compiler_params=pltpu.CompilerParams(dimension_semantics=("parallel",)),
    )(x, w.reshape(1, H))


# ------------------------------ fused SwiGLU MLP ----------------------------

def _mlp_kernel(x_ref, wg_ref, wu_ref, wd_ref, r_ref, o_ref, acc_ref):
    l = pl.program_id(1)

    @pl.when(l == 0)
    def _():
        acc_ref[...] = jnp.zeros_like(acc_ref)

    x = x_ref[...].astype(jnp.bfloat16)
    g = jnp.dot(x, wg_ref[...], preferred_element_type=jnp.float32)
    u = jnp.dot(x, wu_ref[...], preferred_element_type=jnp.float32)
    # SiLU(gate) * up in f32.
    h = g / (1.0 + jnp.exp(-g)) * u
    acc_ref[...] += jnp.dot(h.astype(jnp.bfloat16), wd_ref[...],
                            preferred_element_type=jnp.float32)

    @pl.when(l == pl.num_programs(1) - 1)
    def _():
        # Fused residual add of the layer input.
        o_ref[...] = (acc_ref[...] + r_ref[...].astype(jnp.float32)).astype(o_ref.dtype)


def pallas_mlp(x, wg, wu, wd, residual, *, bm=128, bi=256):
    M, H = x.shape
    I = wg.shape[1]
    tm, ti = _tile(M, bm), _tile(I, bi)
    grid = (M // tm, I // ti)
    return pl.pallas_call(
        _mlp_kernel,
        out_shape=jax.ShapeDtypeStruct((M, H), jnp.float32),
        grid=grid,
        in_specs=[pl.BlockSpec((tm, H), lambda i, l: (i, 0)),
                  pl.BlockSpec((H, ti), lambda i, l: (0, l)),
                  pl.BlockSpec((H, ti), lambda i, l: (0, l)),
                  pl.BlockSpec((ti, H), lambda i, l: (l, 0)),
                  pl.BlockSpec((tm, H), lambda i, l: (i, 0))],
        out_specs=pl.BlockSpec((tm, H), lambda i, l: (i, 0)),
        scratch_shapes=[pltpu.VMEM((tm, H), jnp.float32)],
        compiler_params=pltpu.CompilerParams(
            dimension_semantics=("parallel", "arbitrary")),
    )(x, wg, wu, wd, residual)


# ----------------------- GQA attention + KeyFormer score --------------------

def _attn_kernel(q_ref, k_ref, v_ref, u_ref, o_ref, kf_ref, kf_acc,
                 *, norm_factor, tau, group_size, q_tile):
    h = pl.program_id(1)
    qi = pl.program_id(2)
    nq = pl.num_programs(2)

    # Zero the per-group kf accumulator at the first (head, q-block) of a group.
    @pl.when(jnp.logical_and(h % group_size == 0, qi == 0))
    def _():
        kf_acc[...] = jnp.zeros_like(kf_acc)

    q = q_ref[0, 0].astype(jnp.bfloat16)          # (tq, D)
    kt = k_ref[0, 0].astype(jnp.bfloat16)         # (S,  D)
    v = v_ref[0, 0].astype(jnp.bfloat16)          # (S,  D)
    S = kt.shape[0]

    # q @ k^T on the MXU (bf16 operands, f32 accumulation).
    scores = jax.lax.dot_general(
        q, kt, (((1,), (1,)), ((), ())),
        preferred_element_type=jnp.float32) * jnp.float32(1.0 / norm_factor)

    row = jax.lax.broadcasted_iota(jnp.int32, (q_tile, S), 0) + qi * q_tile
    col = jax.lax.broadcasted_iota(jnp.int32, (q_tile, S), 1)
    causal = row >= col
    neg = jnp.float32(-1e30)

    # Causal softmax -> attention output (all softmax math in f32).
    s = jnp.where(causal, scores, neg)
    m = jnp.max(s, axis=-1, keepdims=True)
    e = jnp.exp(s - m)
    p = e / jnp.sum(e, axis=-1, keepdims=True)
    o_ref[0, 0] = jnp.dot(p.astype(jnp.bfloat16), v,
                          preferred_element_type=jnp.float32).astype(o_ref.dtype)

    # KeyFormer gumbel-perturbed key score; uniform noise streamed from HBM
    # (same [B, Hq, S, S] tensor the PyTorch reference materializes).
    u = jnp.maximum(u_ref[0, 0].astype(jnp.float32), jnp.float32(1e-8))
    gumbel = -jnp.log(-jnp.log(u))
    sg = jnp.where(causal, (scores + gumbel) * jnp.float32(1.0 / tau), neg)
    mg = jnp.max(sg, axis=-1, keepdims=True)
    eg = jnp.exp(sg - mg)
    pg = eg / jnp.sum(eg, axis=-1, keepdims=True)
    kf_acc[...] += jnp.sum(pg, axis=0, keepdims=True)           # (1, S)

    # Single lane-dense store per KV group.
    @pl.when(jnp.logical_and(h % group_size == group_size - 1, qi == nq - 1))
    def _():
        kf_ref[0, 0] = kf_acc[...]


def pallas_attention(q, k, v, exp_rand, *, norm_factor, tau, group_size,
                     q_block=128):
    # q: [B, Hq, S, D]; k, v: [B, Hkv, S, D]; exp_rand: [B, Hq, S, S] f32
    B, Hq, S, D = q.shape
    Hkv = k.shape[1]
    tq = _tile(S, q_block)
    nq = S // tq
    kernel = partial(_attn_kernel, norm_factor=norm_factor, tau=tau,
                     group_size=group_size, q_tile=tq)
    out, kf = pl.pallas_call(
        kernel,
        out_shape=(jax.ShapeDtypeStruct((B, Hq, S, D), jnp.float32),
                   jax.ShapeDtypeStruct((B, Hkv, 1, S), jnp.float32)),
        grid=(B, Hq, nq),
        in_specs=[pl.BlockSpec((1, 1, tq, D), lambda b, h, qi: (b, h, qi, 0)),
                  pl.BlockSpec((1, 1, S, D),
                               lambda b, h, qi: (b, h // group_size, 0, 0)),
                  pl.BlockSpec((1, 1, S, D),
                               lambda b, h, qi: (b, h // group_size, 0, 0)),
                  pl.BlockSpec((1, 1, tq, S), lambda b, h, qi: (b, h, qi, 0))],
        out_specs=(pl.BlockSpec((1, 1, tq, D), lambda b, h, qi: (b, h, qi, 0)),
                   pl.BlockSpec((1, 1, 1, S),
                                lambda b, h, qi: (b, h // group_size, 0, 0))),
        scratch_shapes=[pltpu.VMEM((1, S), jnp.float32)],
        compiler_params=pltpu.CompilerParams(
            dimension_semantics=("parallel", "arbitrary", "arbitrary")),
    )(q, k, v, exp_rand)
    return out, kf.reshape(B, Hkv, S)


# ------------------------------- JAX glue ---------------------------------

def apply_rope(x, base):
    # NeoX-style half rotation (matches rotary_embedding_online_cuda).
    B, S, Hx, D = x.shape
    half = D // 2
    inv_freq = 1.0 / (base ** (jnp.arange(0, D, 2, dtype=jnp.float32) / D))
    ang = jnp.arange(S, dtype=jnp.float32)[:, None] * inv_freq[None, :]   # [S, half]
    cos = jnp.cos(ang)[None, :, None, :]
    sin = jnp.sin(ang)[None, :, None, :]
    x1, x2 = x[..., :half], x[..., half:]
    return jnp.concatenate([x1 * cos - x2 * sin, x2 * cos + x1 * sin],
                           axis=-1).astype(x.dtype)


def attention_block(xn, res, lp, cfg, layer_key):
    B, S, H = xn.shape
    Hq, Hkv, D = cfg["num_heads"], cfg["num_kv_heads"], cfg["head_dim"]
    KVH = Hkv * D
    group_size = Hq // Hkv

    qkv = pallas_linear(xn.reshape(B * S, H), lp["qkv_w"]).reshape(B, S, H + 2 * KVH)
    q = qkv[..., :H].reshape(B, S, Hq, D)
    k = qkv[..., H:H + KVH].reshape(B, S, Hkv, D)
    v = qkv[..., H + KVH:].reshape(B, S, Hkv, D)

    # RoPE + head-major transpose stay in XLA (one fused elementwise pass); the
    # post-RoPE k is also needed in HBM for the KV-cache gather below.
    q = apply_rope(q, cfg["rotary_base"])
    k = apply_rope(k, cfg["rotary_base"])

    # KeyFormer uniform noise, identical shape/dtype/range to the reference's
    # exp_rand (torch .uniform_(1e-8, 1.0) on [B, Hq, S, S]).
    exp_rand = jax.random.uniform(layer_key, (B, Hq, S, S), dtype=jnp.float32,
                                  minval=1e-8, maxval=1.0)

    out, kf_score = pallas_attention(
        q.transpose(0, 2, 1, 3), k.transpose(0, 2, 1, 3), v.transpose(0, 2, 1, 3),
        exp_rand, norm_factor=math.sqrt(D), tau=cfg["tau"],
        group_size=group_size)
    out = out.transpose(0, 2, 1, 3).reshape(B * S, H)

    # KV-cache selection: top-k over kf_score + gather (glue; no clean Pallas path).
    cb = cfg["cache_budget"]
    _, idx = jax.lax.top_k(kf_score, cb)            # [B, Hkv, cb]
    idx = jnp.sort(idx, axis=-1)
    idx_full = jnp.broadcast_to(idx.transpose(0, 2, 1)[..., None], (B, cb, Hkv, D))
    k_cache = jnp.take_along_axis(k, idx_full, axis=1)[:, None]   # [B,1,cb,Hkv,D]
    v_cache = jnp.take_along_axis(v, idx_full, axis=1)[:, None]
    kv_cache = jnp.concatenate([k_cache, v_cache], axis=1)        # [B,2,cb,Hkv,D]

    # out_proj with the layer residual fused into the kernel epilogue.
    y = pallas_linear(out, lp["out_w"],
                      residual=res.reshape(B * S, H)).reshape(B, S, H)
    return y, (kf_score, kv_cache)


def llama_forward(token_ids, params, cfg, rng_key):
    B, S = token_ids.shape
    H = cfg["hidden_size"]
    x = params["embed_tokens"][token_ids]                 # embedding gather (glue)
    kv_caches = []
    for li, lp in enumerate(params["layers"]):
        layer_key = jax.random.fold_in(rng_key, li)
        xn = pallas_rmsnorm(x.reshape(B * S, H), lp["input_ln"],
                            cfg["rms_norm_eps"]).reshape(B, S, H)
        x, kv = attention_block(xn, x, lp, cfg, layer_key)  # residual fused in kernel
        xn = pallas_rmsnorm(x.reshape(B * S, H), lp["post_ln"], cfg["rms_norm_eps"])
        x = pallas_mlp(xn, lp["gate_w"], lp["up_w"], lp["down_w"],
                       x.reshape(B * S, H)).reshape(B, S, H)   # residual fused
        kv_caches.append(kv)
    x = pallas_rmsnorm(x.reshape(B * S, H), params["final_ln"],
                       cfg["rms_norm_eps"]).reshape(B, S, H)
    return x, kv_caches


# ---------------------------- parameter init -------------------------------

def init_params(cfg, key):
    H, I = cfg["hidden_size"], cfg["intermediate_size"]
    Hkv, D = cfg["num_kv_heads"], cfg["head_dim"]
    KVH = Hkv * D
    V = cfg["vocab_size"]
    L = cfg["num_layers"]
    bf16 = jnp.bfloat16

    def normal(k, shape, scale, dtype=jnp.float32):
        return (scale * jax.random.normal(k, shape, dtype=jnp.float32)).astype(dtype)

    keys = iter(jax.random.split(key, 2 + 7 * L))
    params = {
        "embed_tokens": normal(next(keys), (V, H), 0.02),
        "final_ln": jnp.ones((H,), jnp.float32) + normal(next(keys), (H,), 0.01),
        "layers": [],
    }
    for _ in range(L):
        params["layers"].append({
            "input_ln": jnp.ones((H,), jnp.float32) + normal(next(keys), (H,), 0.01),
            # Linear weights stored pre-transposed ([in, out] == W.T of nn.Linear)
            # and in bf16 (MXU operand / HBM storage dtype); matmuls accumulate f32.
            "qkv_w": normal(next(keys), (H, H + 2 * KVH), 1.0 / math.sqrt(H), bf16),
            "out_w": normal(next(keys), (H, H), 1.0 / math.sqrt(H), bf16),
            "post_ln": jnp.ones((H,), jnp.float32) + normal(next(keys), (H,), 0.01),
            "gate_w": normal(next(keys), (H, I), 1.0 / math.sqrt(H), bf16),
            "up_w": normal(next(keys), (H, I), 1.0 / math.sqrt(H), bf16),
            "down_w": normal(next(keys), (I, H), 1.0 / math.sqrt(I), bf16),
        })
    return params


# --------------------------------- main ------------------------------------

if __name__ == "__main__":
    cfg = dict(
        vocab_size=256,
        hidden_size=512,
        num_heads=4,
        num_kv_heads=2,
        head_dim=128,
        intermediate_size=1024,
        num_layers=2,
        rms_norm_eps=1e-6,
        rotary_base=10000.0,
        tau=1.0,
        cache_budget=16,
    )
    B, S = 2, 128

    root = jax.random.PRNGKey(0)
    params = init_params(cfg, jax.random.fold_in(root, 1))
    token_ids = jax.random.randint(jax.random.fold_in(root, 2), (B, S), 0,
                                   cfg["vocab_size"], dtype=jnp.int32)

    x, kv_caches = llama_forward(token_ids, params, cfg, jax.random.fold_in(root, 3))
    jax.block_until_ready(x)
    jax.block_until_ready(kv_caches)

    assert x.shape == (B, S, cfg["hidden_size"])
    assert len(kv_caches) == cfg["num_layers"]
    kf_score, kv_cache = kv_caches[0]
    assert kf_score.shape == (B, cfg["num_kv_heads"], S)
    assert kv_cache.shape == (B, 2, cfg["cache_budget"], cfg["num_kv_heads"],
                              cfg["head_dim"])
    assert bool(jnp.all(jnp.isfinite(x)))
    print("KERNEL_OK")
</pallas_src>

<mosaic_0001>
module attributes {stable_mosaic.version = 11 : i64} {
  func.func @_rmsnorm_kernel(%arg0: i32, %arg1: memref<256x512xf32, #tpu.memory_space<vmem>>, %arg2: memref<1x512xf32, #tpu.memory_space<vmem>>, %arg3: memref<256x512xf32, #tpu.memory_space<vmem>>) attributes {dimension_semantics = [#tpu.dimension_semantics<parallel>], iteration_bounds = array<i64: 1>, scalar_prefetch = 0 : i64, scratch_operands = 0 : i64, tpu.core_type = #tpu.core_type<tc>, window_params = [{transform_indices = @transform_0, window_bounds = array<i64: 256, 512>}, {pipeline_mode = #tpu.pipeline_mode<synchronous>, transform_indices = @transform_1, window_bounds = array<i64: 1, 512>}, {transform_indices = @transform_2, window_bounds = array<i64: 256, 512>}]} {
    %c0 = arith.constant 0 : index
    %c0_0 = arith.constant 0 : index
    %0 = vector.load %arg1[%c0, %c0_0] : memref<256x512xf32, #tpu.memory_space<vmem>>, vector<256x512xf32>
    %1 = arith.mulf %0, %0 : vector<256x512xf32>
    %cst = arith.constant dense<0.000000e+00> : vector<256xf32>
    %2 = vector.multi_reduction <add>, %1, %cst [1] : vector<256x512xf32> to vector<256xf32>
    %3 = vector.shape_cast %2 : vector<256xf32> to vector<256x1xf32>
    %cst_1 = arith.constant 5.120000e+02 : f32
    %4 = vector.broadcast %cst_1 : f32 to vector<256x1xf32>
    %5 = arith.divf %3, %4 : vector<256x1xf32>
    %cst_2 = arith.constant 9.99999997E-7 : f32
    %6 = vector.broadcast %cst_2 : f32 to vector<256x1xf32>
    %7 = arith.addf %5, %6 : vector<256x1xf32>
    %8 = math.rsqrt %7 : vector<256x1xf32>
    %9 = vector.broadcast %8 : vector<256x1xf32> to vector<256x512xf32>
    %10 = arith.mulf %0, %9 : vector<256x512xf32>
    %c0_3 = arith.constant 0 : index
    %c0_4 = arith.constant 0 : index
    %11 = vector.load %arg2[%c0_3, %c0_4] : memref<1x512xf32, #tpu.memory_space<vmem>>, vector<1x512xf32>
    %12 = vector.broadcast %11 : vector<1x512xf32> to vector<256x512xf32>
    %13 = arith.mulf %10, %12 : vector<256x512xf32>
    %c0_5 = arith.constant 0 : index
    %c0_6 = arith.constant 0 : index
    %14 = vector.load %arg3[%c0_5, %c0_6] : memref<256x512xf32, #tpu.memory_space<vmem>>, vector<256x512xf32>
    tpu.vector_store %arg3[%c0_5, %c0_6], %13 {strides = array<i32>} : memref<256x512xf32, #tpu.memory_space<vmem>>, vector<256x512xf32>,
    return
  }
  func.func @transform_0(%arg0: i32) -> (i32, i32) {
    %c0_i32 = arith.constant 0 : i32
    %c0_i32_0 = arith.constant 0 : i32
    return %arg0, %c0_i32 : i32, i32
  }
  func.func @transform_1(%arg0: i32) -> (i32, i32) {
    %c0_i32 = arith.constant 0 : i32
    %c0_i32_0 = arith.constant 0 : i32
    %c0_i32_1 = arith.constant 0 : i32
    return %c0_i32, %c0_i32_0 : i32, i32
  }
  func.func @transform_2(%arg0: i32) -> (i32, i32) {
    %c0_i32 = arith.constant 0 : i32
    %c0_i32_0 = arith.constant 0 : i32
    return %arg0, %c0_i32 : i32, i32
  }
}

</mosaic_0001>

<llo_original>
// kernel: tpu_custom_call.1
$region0: #{tpu_custom_call.1}
  #allocation0 [shape = 'u32[]', space=smem, size = 0x4, offset = 0x4, fixed_abs, tag = 'smem constant byte address 0x4 - core index']
  #allocation1 [shape = 'u32[144,128]{1,0:T(1,128)}', space=vmem, size = 0x12000, scoped, tag = 'internal scratch']
  %s0 = inlined_call_operand.hbm [shape: f32[256,512], index: 0, kind: input, shape index: {}]
  %s1 = inlined_call_operand.hbm [shape: f32[1,512], index: 1, kind: input, shape index: {}]
  %s2 = inlined_call_operand.hbm [shape: f32[256,512], index: 2, kind: output, shape index: {}]
  %s3 = sld [smem:[#allocation0]]
  $region26: #{tpu_custom_call.1} parent=0
    _
  %s5 = ssub.s32 1, %s3
  %s6 = scalar_select 0, %s5, %s3
  $region1: #{tpu_custom_call.1} parent=0
    #allocation2 [shape = 'u8[524288]{0}', space=vmem, size = 0x80000, scoped, tag = 'input window, operand 0, single buffered']
    #allocation3 [shape = 's32[1]{0}', space=sflag, size = 0x4, scoped, tag = 'scoped memory for tpu_custom_call.1']
    #allocation4 [shape = 's32[1]{0}', space=sflag, size = 0x4, scoped, tag = 'scoped memory for tpu_custom_call.1']
    #allocation5 [shape = 'u8[2048]{0}', space=vmem, size = 0x800, scoped, tag = 'input window, operand 1, single buffered']
    #allocation6 [shape = 's32[1]{0}', space=sflag, size = 0x4, scoped, tag = 'scoped memory for tpu_custom_call.1']
    #allocation7 [shape = 'u8[524288]{0}', space=vmem, size = 0x80000, scoped, tag = 'output window, operand 0, single buffered']
    %7 = vsyncpa [#allocation3], 0
    %8 = vsyncpa [#allocation6], 0
    %9 = vsyncpa [#allocation4], 0
    // Predicated region
    $region2: #{tpu_custom_call.1} parent=1 // pred_check
      _
    $region3: #{tpu_custom_call.1} parent=1 // pred_check_branch
      %11 = sbr.rel (0) target = $region5
    $region4: #{tpu_custom_call.1} parent=1 // pred_region
      %s13 = ssub.s32 16384, 16384
      %14 = vsyncadd [#allocation3], %s13
      %s15 = sshll.u32 [#allocation2], 4
      %s16 = int_to_ptr.vmem [resolvable:$true] %s15
      %21 = dma.hbm_to_vmem [thread:$0]  %s0, 16384, %s16, [#allocation3], 512, 512, 32
    $region5: #{tpu_custom_call.1} parent=1 // pred_fallthru
      _
    // Predicated region
    $region6: #{tpu_custom_call.1} parent=1 // pred_check
      _
    $region7: #{tpu_custom_call.1} parent=1 // pred_check_branch
      %23 = sbr.rel (0) target = $region9
    $region8: #{tpu_custom_call.1} parent=1 // pred_region
      %s25 = ssub.s32 64, 64
      %26 = vsyncadd [#allocation6], %s25
      %s28 = sshll.u32 [#allocation5], 4
      %s29 = int_to_ptr.vmem [resolvable:$true] %s28
      %31 = dma.hbm_to_vmem [thread:$0]  %s1, 64, %s29, [#allocation6]
    $region9: #{tpu_custom_call.1} parent=1 // pred_fallthru
      _
    // Predicated region
    $region10: #{tpu_custom_call.1} parent=1 // pred_check
      _
    $region11: #{tpu_custom_call.1} parent=1 // pred_check_branch
      %33 = sbr.rel (0) target = $region13
    $region12: #{tpu_custom_call.1} parent=1 // pred_region
      %34 = dma.done [#allocation3], 16384
    $region13: #{tpu_custom_call.1} parent=1 // pred_fallthru
      _
    // Predicated region
    $region14: #{tpu_custom_call.1} parent=1 // pred_check
      _
    $region15: #{tpu_custom_call.1} parent=1 // pred_check_branch
      %36 = sbr.rel (0) target = $region17
    $region16: #{tpu_custom_call.1} parent=1 // pred_region
      %37 = dma.done [#allocation6], 64
    $region17: #{tpu_custom_call.1} parent=1 // pred_fallthru
      _
    %v38 = vld [vmem:[#allocation2] sm:$0xff]
    %v39 = vld [vmem:[#allocation2 + $0x8] sm:$0xff]
    %v40 = vld [vmem:[#allocation2 + $0x10] sm:$0xff]
    %v41 = vld [vmem:[#allocation2 + $0x18] sm:$0xff]
    %v42 = vld [vmem:[#allocation2 + $0x20] sm:$0xff]
    %v43 = vld [vmem:[#allocation2 + $0x28] sm:$0xff]
    %v44 = vld [vmem:[#allocation2 + $0x30] sm:$0xff]
    %v45 = vld [vmem:[#allocation2 + $0x38] sm:$0xff]
    %v46 = vld [vmem:[#allocation2 + $0x40] sm:$0xff]
    %v47 = vld [vmem:[#allocation2 + $0x48] sm:$0xff]
    %v48 = vld [vmem:[#allocation2 + $0x50] sm:$0xff]
    %v49 = vld [vmem:[#allocation2 + $0x58] sm:$0xff]
    %v50 = vld [vmem:[#allocation2 + $0x60] sm:$0xff]
    %v51 = vld [vmem:[#allocation2 + $0x68] sm:$0xff]
    %v52 = vld [vmem:[#allocation2 + $0x70] sm:$0xff]
    %v53 = vld [vmem:[#allocation2 + $0x78] sm:$0xff]
    %v54 = vld [vmem:[#allocation2 + $0x80] sm:$0xff]
    %v55 = vld [vmem:[#allocation2 + $0x88] sm:$0xff]
    %v56 = vld [vmem:[#allocation2 + $0x90] sm:$0xff]
    %v57 = vld [vmem:[#allocation2 + $0x98] sm:$0xff]
    %v58 = vld [vmem:[#allocation2 + $0xa0] sm:$0xff]
    %v59 = vld [vmem:[#allocation2 + $0xa8] sm:$0xff]
    %v60 = vld [vmem:[#allocation2 + $0xb0] sm:$0xff]
    %v61 = vld [vmem:[#allocation2 + $0xb8] sm:$0xff]
    %v62 = vld [vmem:[#allocation2 + $0xc0] sm:$0xff]
    %v63 = vld [vmem:[#allocation2 + $0xc8] sm:$0xff]
    %v64 = vld [vmem:[#allocation2 + $0xd0] sm:$0xff]
    %v65 = vld [vmem:[#allocation2 + $0xd8] sm:$0xff]
    %v66 = vld [vmem:[#allocation2 + $0xe0] sm:$0xff]
    %v67 = vld [vmem:[#allocation2 + $0xe8] sm:$0xff]
    %v68 = vld [vmem:[#allocation2 + $0xf0] sm:$0xff]
    %v69 = vld [vmem:[#allocation2 + $0xf8] sm:$0xff]
    %v70 = vld [vmem:[#allocation2 + $0x100] sm:$0xff]
    %v71 = vld [vmem:[#allocation2 + $0x108] sm:$0xff]
    %v72 = vld [vmem:[#allocation2 + $0x110] sm:$0xff]
    %v73 = vld [vmem:[#allocation2 + $0x118] sm:$0xff]
    %v74 = vld [vmem:[#allocation2 + $0x120] sm:$0xff]
    %v75 = vld [vmem:[#allocation2 + $0x128] sm:$0xff]
    %v76 = vld [vmem:[#allocation2 + $0x130] sm:$0xff]
    %v77 = vld [vmem:[#allocation2 + $0x138] sm:$0xff]
    %v78 = vld [vmem:[#allocation2 + $0x140] sm:$0xff]
    %v79 = vld [vmem:[#allocation2 + $0x148] sm:$0xff]
    %v80 = vld [vmem:[#allocation2 + $0x150] sm:$0xff]
    %v81 = vld [vmem:[#allocation2 + $0x158] sm:$0xff]
    %v82 = vld [vmem:[#allocation2 + $0x160] sm:$0xff]
    %v83 = vld [vmem:[#allocation2 + $0x168] sm:$0xff]
    %v84 = vld [vmem:[#allocation2 + $0x170] sm:$0xff]
    %v85 = vld [vmem:[#allocation2 + $0x178] sm:$0xff]
    %v86 = vld [vmem:[#allocation2 + $0x180] sm:$0xff]
    %v87 = vld [vmem:[#allocation2 + $0x188] sm:$0xff]
    %v88 = vld [vmem:[#allocation2 + $0x190] sm:$0xff]
    %v89 = vld [vmem:[#allocation2 + $0x198] sm:$0xff]
    %v90 = vld [vmem:[#allocation2 + $0x1a0] sm:$0xff]
    %v91 = vld [vmem:[#allocation2 + $0x1a8] sm:$0xff]
    %v92 = vld [vmem:[#allocation2 + $0x1b0] sm:$0xff]
    %v93 = vld [vmem:[#allocation2 + $0x1b8] sm:$0xff]
    %v94 = vld [vmem:[#allocation2 + $0x1c0] sm:$0xff]
    %v95 = vld [vmem:[#allocation2 + $0x1c8] sm:$0xff]
    %v96 = vld [vmem:[#allocation2 + $0x1d0] sm:$0xff]
    %v97 = vld [vmem:[#allocation2 + $0x1d8] sm:$0xff]
    %v98 = vld [vmem:[#allocation2 + $0x1e0] sm:$0xff]
    %v99 = vld [vmem:[#allocation2 + $0x1e8] sm:$0xff]
    %v100 = vld [vmem:[#allocation2 + $0x1f0] sm:$0xff]
    %v101 = vld [vmem:[#allocation2 + $0x1f8] sm:$0xff]
    %v102 = vld [vmem:[#allocation2 + $0x200] sm:$0xff]
    %v103 = vld [vmem:[#allocation2 + $0x208] sm:$0xff]
    %v104 = vld [vmem:[#allocation2 + $0x210] sm:$0xff]
    %v105 = vld [vmem:[#allocation2 + $0x218] sm:$0xff]
    %v106 = vld [vmem:[#allocation2 + $0x220] sm:$0xff]
    %v107 = vld [vmem:[#allocation2 + $0x228] sm:$0xff]
    %v108 = vld [vmem:[#allocation2 + $0x230] sm:$0xff]
    %v109 = vld [vmem:[#allocation2 + $0x238] sm:$0xff]
    %v110 = vld [vmem:[#allocation2 + $0x240] sm:$0xff]
    %v111 = vld [vmem:[#allocation2 + $0x248] sm:$0xff]
    %v112 = vld [vmem:[#allocation2 + $0x250] sm:$0xff]
    %v113 = vld [vmem:[#allocation2 + $0x258] sm:$0xff]
    %v114 = vld [vmem:[#allocation2 + $0x260] sm:$0xff]
    %v115 = vld [vmem:[#allocation2 + $0x268] sm:$0xff]
    %v116 = vld [vmem:[#allocation2 + $0x270] sm:$0xff]
    %v117 = vld [vmem:[#allocation2 + $0x278] sm:$0xff]
    %v118 = vld [vmem:[#allocation2 + $0x280] sm:$0xff]
    %v119 = vld [vmem:[#allocation2 + $0x288] sm:$0xff]
    %v120 = vld [vmem:[#allocation2 + $0x290] sm:$0xff]
    %v121 = vld [vmem:[#allocation2 + $0x298] sm:$0xff]
    %v122 = vld [vmem:[#allocation2 + $0x2a0] sm:$0xff]
    %v123 = vld [vmem:[#allocation2 + $0x2a8] sm:$0xff]
    %v124 = vld [vmem:[#allocation2 + $0x2b0] sm:$0xff]
    %v125 = vld [vmem:[#allocation2 + $0x2b8] sm:$0xff]
    %v126 = vld [vmem:[#allocation2 + $0x2c0] sm:$0xff]
    %v127 = vld [vmem:[#allocation2 + $0x2c8] sm:$0xff]
    %v128 = vld [vmem:[#allocation2 + $0x2d0] sm:$0xff]
    %v129 = vld [vmem:[#allocation2 + $0x2d8] sm:$0xff]
    %v130 = vld [vmem:[#allocation2 + $0x2e0] sm:$0xff]
    %v131 = vld [vmem:[#allocation2 + $0x2e8] sm:$0xff]
    %v132 = vld [vmem:[#allocation2 + $0x2f0] sm:$0xff]
    %v133 = vld [vmem:[#allocation2 + $0x2f8] sm:$0xff]
    %v134 = vld [vmem:[#allocation2 + $0x300] sm:$0xff]
    %v135 = vld [vmem:[#allocation2 + $0x308] sm:$0xff]
    %v136 = vld [vmem:[#allocation2 + $0x310] sm:$0xff]
    %v137 = vld [vmem:[#allocation2 + $0x318] sm:$0xff]
    %v138 = vld [vmem:[#allocation2 + $0x320] sm:$0xff]
    %v139 = vld [vmem:[#allocation2 + $0x328] sm:$0xff]
    %v140 = vld [vmem:[#allocation2 + $0x330] sm:$0xff]
    %v141 = vld [vmem:[#allocation2 + $0x338] sm:$0xff]
    %v142 = vld [vmem:[#allocation2 + $0x340] sm:$0xff]
    %v143 = vld [vmem:[#allocation2 + $0x348] sm:$0xff]
    %v144 = vld [vmem:[#allocation2 + $0x350] sm:$0xff]
    %v145 = vld [vmem:[#allocation2 + $0x358] sm:$0xff]
    %v146 = vld [vmem:[#allocation2 + $0x360] sm:$0xff]
    %v147 = vld [vmem:[#allocation2 + $0x368] sm:$0xff]
    %v148 = vld [vmem:[#allocation2 + $0x370] sm:$0xff]
    %v149 = vld [vmem:[#allocation2 + $0x378] sm:$0xff]
    %v150 = vld [vmem:[#allocation2 + $0x380] sm:$0xff]
    %v151 = vld [vmem:[#allocation2 + $0x388] sm:$0xff]
    %v152 = vld [vmem:[#allocation2 + $0x390] sm:$0xff]
    %v153 = vld [vmem:[#allocation2 + $0x398] sm:$0xff]
    %v154 = vld [vmem:[#allocation2 + $0x3a0] sm:$0xff]
    %v155 = vld [vmem:[#allocation2 + $0x3a8] sm:$0xff]
    %v156 = vld [vmem:[#allocation2 + $0x3b0] sm:$0xff]
    %v157 = vld [vmem:[#allocation2 + $0x3b8] sm:$0xff]
    %v158 = vld [vmem:[#allocation2 + $0x3c0] sm:$0xff]
    %v159 = vld [vmem:[#allocation2 + $0x3c8] sm:$0xff]
    %v160 = vld [vmem:[#allocation2 + $0x3d0] sm:$0xff]
    %v161 = vld [vmem:[#allocation2 + $0x3d8] sm:$0xff]
    %v162 = vld [vmem:[#allocation2 + $0x3e0] sm:$0xff]
    %v163 = vld [vmem:[#allocation2 + $0x3e8] sm:$0xff]
    %v164 = vld [vmem:[#allocation2 + $0x3f0] sm:$0xff]
    %v165 = vld [vmem:[#allocation2 + $0x3f8] sm:$0xff]
    %v166 = vmul.f32 %v38, %v38
    %v167 = vmul.f32 %v39, %v39
    %v168 = vmul.f32 %v40, %v40
    %v169 = vmul.f32 %v41, %v41
    %v170 = vmul.f32 %v42, %v42
    %v171 = vmul.f32 %v43, %v43
    %v172 = vmul.f32 %v44, %v44
    %v173 = vmul.f32 %v45, %v45
    %v174 = vmul.f32 %v46, %v46
    %v175 = vmul.f32 %v47, %v47
    %v176 = vmul.f32 %v48, %v48
    %v177 = vmul.f32 %v49, %v49
    %v178 = vmul.f32 %v50, %v50
    %v179 = vmul.f32 %v51, %v51
    %v180 = vmul.f32 %v52, %v52
    %v181 = vmul.f32 %v53, %v53
    %v182 = vmul.f32 %v54, %v54
    %v183 = vmul.f32 %v55, %v55
    %v184 = vmul.f32 %v56, %v56
    %v185 = vmul.f32 %v57, %v57
    %v186 = vmul.f32 %v58, %v58
    %v187 = vmul.f32 %v59, %v59
    %v188 = vmul.f32 %v60, %v60
    %v189 = vmul.f32 %v61, %v61
    %v190 = vmul.f32 %v62, %v62
    %v191 = vmul.f32 %v63, %v63
    %v192 = vmul.f32 %v64, %v64
    %v193 = vmul.f32 %v65, %v65
    %v194 = vmul.f32 %v66, %v66
    %v195 = vmul.f32 %v67, %v67
    %v196 = vmul.f32 %v68, %v68
    %v197 = vmul.f32 %v69, %v69
    %v198 = vmul.f32 %v70, %v70
    %v199 = vmul.f32 %v71, %v71
    %v200 = vmul.f32 %v72, %v72
    %v201 = vmul.f32 %v73, %v73
    %v202 = vmul.f32 %v74, %v74
    %v203 = vmul.f32 %v75, %v75
    %v204 = vmul.f32 %v76, %v76
    %v205 = vmul.f32 %v77, %v77
    %v206 = vmul.f32 %v78, %v78
    %v207 = vmul.f32 %v79, %v79
    %v208 = vmul.f32 %v80, %v80
    %v209 = vmul.f32 %v81, %v81
    %v210 = vmul.f32 %v82, %v82
    %v211 = vmul.f32 %v83, %v83
    %v212 = vmul.f32 %v84, %v84
    %v213 = vmul.f32 %v85, %v85
    %v214 = vmul.f32 %v86, %v86
    %v215 = vmul.f32 %v87, %v87
    %v216 = vmul.f32 %v88, %v88
    %v217 = vmul.f32 %v89, %v89
    %v218 = vmul.f32 %v90, %v90
    %v219 = vmul.f32 %v91, %v91
    %v220 = vmul.f32 %v92, %v92
    %v221 = vmul.f32 %v93, %v93
    %v222 = vmul.f32 %v94, %v94
    %v223 = vmul.f32 %v95, %v95
    %v224 = vmul.f32 %v96, %v96
    %v225 = vmul.f32 %v97, %v97
    %v226 = vmul.f32 %v98, %v98
    %v227 = vmul.f32 %v99, %v99
    %v228 = vmul.f32 %v100, %v100
    %v229 = vmul.f32 %v101, %v101
    %v230 = vmul.f32 %v102, %v102
    %v231 = vmul.f32 %v103, %v103
    %v232 = vmul.f32 %v104, %v104
    %v233 = vmul.f32 %v105, %v105
    %v234 = vmul.f32 %v106, %v106
    %v235 = vmul.f32 %v107, %v107
    %v236 = vmul.f32 %v108, %v108
    %v237 = vmul.f32 %v109, %v109
    %v238 = vmul.f32 %v110, %v110
    %v239 = vmul.f32 %v111, %v111
    %v240 = vmul.f32 %v112, %v112
    %v241 = vmul.f32 %v113, %v113
    %v242 = vmul.f32 %v114, %v114
    %v243 = vmul.f32 %v115, %v115
    %v244 = vmul.f32 %v116, %v116
    %v245 = vmul.f32 %v117, %v117
    %v246 = vmul.f32 %v118, %v118
    %v247 = vmul.f32 %v119, %v119
    %v248 = vmul.f32 %v120, %v120
    %v249 = vmul.f32 %v121, %v121
    %v250 = vmul.f32 %v122, %v122
    %v251 = vmul.f32 %v123, %v123
    %v252 = vmul.f32 %v124, %v124
    %v253 = vmul.f32 %v125, %v125
    %v254 = vmul.f32 %v126, %v126
    %v255 = vmul.f32 %v127, %v127
    %v256 = vmul.f32 %v128, %v128
    %v257 = vmul.f32 %v129, %v129
    %v258 = vmul.f32 %v130, %v130
    %v259 = vmul.f32 %v131, %v131
    %v260 = vmul.f32 %v132, %v132
    %v261 = vmul.f32 %v133, %v133
    %v262 = vmul.f32 %v134, %v134
    %v263 = vmul.f32 %v135, %v135
    %v264 = vmul.f32 %v136, %v136
    %v265 = vmul.f32 %v137, %v137
    %v266 = vmul.f32 %v138, %v138
    %v267 = vmul.f32 %v139, %v139
    %v268 = vmul.f32 %v140, %v140
    %v269 = vmul.f32 %v141, %v141
    %v270 = vmul.f32 %v142, %v142
    %v271 = vmul.f32 %v143, %v143
    %v272 = vmul.f32 %v144, %v144
    %v273 = vmul.f32 %v145, %v145
    %v274 = vmul.f32 %v146, %v146
    %v275 = vmul.f32 %v147, %v147
    %v276 = vmul.f32 %v148, %v148
    %v277 = vmul.f32 %v149, %v149
    %v278 = vmul.f32 %v150, %v150
    %v279 = vmul.f32 %v151, %v151
    %v280 = vmul.f32 %v152, %v152
    %v281 = vmul.f32 %v153, %v153
    %v282 = vmul.f32 %v154, %v154
    %v283 = vmul.f32 %v155, %v155
    %v284 = vmul.f32 %v156, %v156
    %v285 = vmul.f32 %v157, %v157
    %v286 = vmul.f32 %v158, %v158
    %v287 = vmul.f32 %v159, %v159
    %v288 = vmul.f32 %v160, %v160
    %v289 = vmul.f32 %v161, %v161
    %v290 = vmul.f32 %v162, %v162
    %v291 = vmul.f32 %v163, %v163
    %v292 = vmul.f32 %v164, %v164
    %v293 = vmul.f32 %v165, %v165
    %v294 = vadd.f32 %v166, %v167
    %v295 = vadd.f32 %v294, %v168
    %v296 = vadd.f32 %v295, %v169
    %297 = vadd.xlane.f32.xlu0 %v296
    %v298 = vpop.xlane.xlu0 %297
    %v299 = vadd.f32 %v170, %v171
    %v300 = vadd.f32 %v299, %v172
    %v301 = vadd.f32 %v300, %v173
    %302 = vadd.xlane.f32.xlu0 %v301
    %v303 = vpop.xlane.xlu0 %302
    %v304 = vadd.f32 %v174, %v175
    %v305 = vadd.f32 %v304, %v176
    %v306 = vadd.f32 %v305, %v177
    %307 = vadd.xlane.f32.xlu0 %v306
    %v308 = vpop.xlane.xlu0 %307
    %v309 = vadd.f32 %v178, %v179
    %v310 = vadd.f32 %v309, %v180
    %v311 = vadd.f32 %v310, %v181
    %312 = vadd.xlane.f32.xlu0 %v311
    %v313 = vpop.xlane.xlu0 %312
    %v314 = vadd.f32 %v182, %v183
    %v315 = vadd.f32 %v314, %v184
    %v316 = vadd.f32 %v315, %v185
    %317 = vadd.xlane.f32.xlu0 %v316
    %v318 = vpop.xlane.xlu0 %317
    %v319 = vadd.f32 %v186, %v187
    %v320 = vadd.f32 %v319, %v188
    %v321 = vadd.f32 %v320, %v189
    %322 = vadd.xlane.f32.xlu0 %v321
    %v323 = vpop.xlane.xlu0 %322
    %v324 = vadd.f32 %v190, %v191
    %v325 = vadd.f32 %v324, %v192
    %v326 = vadd.f32 %v325, %v193
    %327 = vadd.xlane.f32.xlu0 %v326
    %v328 = vpop.xlane.xlu0 %327
    %v329 = vadd.f32 %v194, %v195
    %v330 = vadd.f32 %v329, %v196
    %v331 = vadd.f32 %v330, %v197
    %332 = vadd.xlane.f32.xlu0 %v331
    %v333 = vpop.xlane.xlu0 %332
    %v334 = vadd.f32 %v198, %v199
    %v335 = vadd.f32 %v334, %v200
    %v336 = vadd.f32 %v335, %v201
    %337 = vadd.xlane.f32.xlu0 %v336
    %v338 = vpop.xlane.xlu0 %337
    %v339 = vadd.f32 %v202, %v203
    %v340 = vadd.f32 %v339, %v204
    %v341 = vadd.f32 %v340, %v205
    %342 = vadd.xlane.f32.xlu0 %v341
    %v343 = vpop.xlane.xlu0 %342
    %v344 = vadd.f32 %v206, %v207
    %v345 = vadd.f32 %v344, %v208
    %v346 = vadd.f32 %v345, %v209
    %347 = vadd.xlane.f32.xlu0 %v346
    %v348 = vpop.xlane.xlu0 %347
    %v349 = vadd.f32 %v210, %v211
    %v350 = vadd.f32 %v349, %v212
    %v351 = vadd.f32 %v350, %v213
    %352 = vadd.xlane.f32.xlu0 %v351
    %v353 = vpop.xlane.xlu0 %352
    %v354 = vadd.f32 %v214, %v215
    %v355 = vadd.f32 %v354, %v216
    %v356 = vadd.f32 %v355, %v217
    %357 = vadd.xlane.f32.xlu0 %v356
    %v358 = vpop.xlane.xlu0 %357
    %v359 = vadd.f32 %v218, %v219
    %v360 = vadd.f32 %v359, %v220
    %v361 = vadd.f32 %v360, %v221
    %362 = vadd.xlane.f32.xlu0 %v361
    %v363 = vpop.xlane.xlu0 %362
    %v364 = vadd.f32 %v222, %v223
    %v365 = vadd.f32 %v364, %v224
    %v366 = vadd.f32 %v365, %v225
    %367 = vadd.xlane.f32.xlu0 %v366
    %v368 = vpop.xlane.xlu0 %367
    %v369 = vadd.f32 %v226, %v227
    %v370 = vadd.f32 %v369, %v228
    %v371 = vadd.f32 %v370, %v229
    %372 = vadd.xlane.f32.xlu0 %v371
    %v373 = vpop.xlane.xlu0 %372
    %v374 = vadd.f32 %v230, %v231
    %v375 = vadd.f32 %v374, %v232
    %v376 = vadd.f32 %v375, %v233
    %377 = vadd.xlane.f32.xlu0 %v376
    %v378 = vpop.xlane.xlu0 %377
    %v379 = vadd.f32 %v234, %v235
    %v380 = vadd.f32 %v379, %v236
    %v381 = vadd.f32 %v380, %v237
    %382 = vadd.xlane.f32.xlu0 %v381
    %v383 = vpop.xlane.xlu0 %382
    %v384 = vadd.f32 %v238, %v239
    %v385 = vadd.f32 %v384, %v240
    %v386 = vadd.f32 %v385, %v241
    %387 = vadd.xlane.f32.xlu0 %v386
    %v388 = vpop.xlane.xlu0 %387
    %v389 = vadd.f32 %v242, %v243
    %v390 = vadd.f32 %v389, %v244
    %v391 = vadd.f32 %v390, %v245
    %392 = vadd.xlane.f32.xlu0 %v391
    %v393 = vpop.xlane.xlu0 %392
    %v394 = vadd.f32 %v246, %v247
    %v395 = vadd.f32 %v394, %v248
    %v396 = vadd.f32 %v395, %v249
    %397 = vadd.xlane.f32.xlu0 %v396
    %v398 = vpop.xlane.xlu0 %397
    %v399 = vadd.f32 %v250, %v251
    %v400 = vadd.f32 %v399, %v252
    %v401 = vadd.f32 %v400, %v253
    %402 = vadd.xlane.f32.xlu0 %v401
    %v403 = vpop.xlane.xlu0 %402
    %v404 = vadd.f32 %v254, %v255
    %v405 = vadd.f32 %v404, %v256
    %v406 = vadd.f32 %v405, %v257
    %407 = vadd.xlane.f32.xlu0 %v406
    %v408 = vpop.xlane.xlu0 %407
    %v409 = vadd.f32 %v258, %v259
    %v410 = vadd.f32 %v409, %v260
    %v411 = vadd.f32 %v410, %v261
    %412 = vadd.xlane.f32.xlu0 %v411
    %v413 = vpop.xlane.xlu0 %412
    %v414 = vadd.f32 %v262, %v263
    %v415 = vadd.f32 %v414, %v264
    %v416 = vadd.f32 %v415, %v265
    %417 = vadd.xlane.f32.xlu0 %v416
    %v418 = vpop.xlane.xlu0 %417
    %v419 = vadd.f32 %v266, %v267
    %v420 = vadd.f32 %v419, %v268
    %v421 = vadd.f32 %v420, %v269
    %422 = vadd.xlane.f32.xlu0 %v421
    %v423 = vpop.xlane.xlu0 %422
    %v424 = vadd.f32 %v270, %v271
    %v425 = vadd.f32 %v424, %v272
    %v426 = vadd.f32 %v425, %v273
    %427 = vadd.xlane.f32.xlu0 %v426
    %v428 = vpop.xlane.xlu0 %427
    %v429 = vadd.f32 %v274, %v275
    %v430 = vadd.f32 %v429, %v276
    %v431 = vadd.f32 %v430, %v277
    %432 = vadd.xlane.f32.xlu0 %v431
    %v433 = vpop.xlane.xlu0 %432
    %v434 = vadd.f32 %v278, %v279
    %v435 = vadd.f32 %v434, %v280
    %v436 = vadd.f32 %v435, %v281
    %437 = vadd.xlane.f32.xlu0 %v436
    %v438 = vpop.xlane.xlu0 %437
    %v439 = vadd.f32 %v282, %v283
    %v440 = vadd.f32 %v439, %v284
    %v441 = vadd.f32 %v440, %v285
    %442 = vadd.xlane.f32.xlu0 %v441
    %v443 = vpop.xlane.xlu0 %442
    %v444 = vadd.f32 %v286, %v287
    %v445 = vadd.f32 %v444, %v288
    %v446 = vadd.f32 %v445, %v289
    %447 = vadd.xlane.f32.xlu0 %v446
    %v448 = vpop.xlane.xlu0 %447
    %v449 = vadd.f32 %v290, %v291
    %v450 = vadd.f32 %v449, %v292
    %v451 = vadd.f32 %v450, %v293
    %452 = vadd.xlane.f32.xlu0 %v451
    %v453 = vpop.xlane.xlu0 %452
    %v454 = vrcp.pop 512.0
    %v455 = vmul.f32 %v298, %v454
    %v456 = vmul.f32 %v303, %v454
    %v457 = vmul.f32 %v308, %v454
    %v458 = vmul.f32 %v313, %v454
    %v459 = vmul.f32 %v318, %v454
    %v460 = vmul.f32 %v323, %v454
    %v461 = vmul.f32 %v328, %v454
    %v462 = vmul.f32 %v333, %v454
    %v463 = vmul.f32 %v338, %v454
    %v464 = vmul.f32 %v343, %v454
    %v465 = vmul.f32 %v348, %v454
    %v466 = vmul.f32 %v353, %v454
    %v467 = vmul.f32 %v358, %v454
    %v468 = vmul.f32 %v363, %v454
    %v469 = vmul.f32 %v368, %v454
    %v470 = vmul.f32 %v373, %v454
    %v471 = vmul.f32 %v378, %v454
    %v472 = vmul.f32 %v383, %v454
    %v473 = vmul.f32 %v388, %v454
    %v474 = vmul.f32 %v393, %v454
    %v475 = vmul.f32 %v398, %v454
    %v476 = vmul.f32 %v403, %v454
    %v477 = vmul.f32 %v408, %v454
    %v478 = vmul.f32 %v413, %v454
    %v479 = vmul.f32 %v418, %v454
    %v480 = vmul.f32 %v423, %v454
    %v481 = vmul.f32 %v428, %v454
    %v482 = vmul.f32 %v433, %v454
    %v483 = vmul.f32 %v438, %v454
    %v484 = vmul.f32 %v443, %v454
    %v485 = vmul.f32 %v448, %v454
    %v486 = vmul.f32 %v453, %v454
    %v487 = vadd.f32 %v455, 1e-06
    %v488 = vadd.f32 %v456, 1e-06
    %v489 = vadd.f32 %v457, 1e-06
    %v490 = vadd.f32 %v458, 1e-06
    %v491 = vadd.f32 %v459, 1e-06
    %v492 = vadd.f32 %v460, 1e-06
    %v493 = vadd.f32 %v461, 1e-06
    %v494 = vadd.f32 %v462, 1e-06
    %v495 = vadd.f32 %v463, 1e-06
    %v496 = vadd.f32 %v464, 1e-06
    %v497 = vadd.f32 %v465, 1e-06
    %v498 = vadd.f32 %v466, 1e-06
    %v499 = vadd.f32 %v467, 1e-06
    %v500 = vadd.f32 %v468, 1e-06
    %v501 = vadd.f32 %v469, 1e-06
    %v502 = vadd.f32 %v470, 1e-06
    %v503 = vadd.f32 %v471, 1e-06
    %v504 = vadd.f32 %v472, 1e-06
    %v505 = vadd.f32 %v473, 1e-06
    %v506 = vadd.f32 %v474, 1e-06
    %v507 = vadd.f32 %v475, 1e-06
    %v508 = vadd.f32 %v476, 1e-06
    %v509 = vadd.f32 %v477, 1e-06
    %v510 = vadd.f32 %v478, 1e-06
    %v511 = vadd.f32 %v479, 1e-06
    %v512 = vadd.f32 %v480, 1e-06
    %v513 = vadd.f32 %v481, 1e-06
    %v514 = vadd.f32 %v482, 1e-06
    %v515 = vadd.f32 %v483, 1e-06
    %v516 = vadd.f32 %v484, 1e-06
    %v517 = vadd.f32 %v485, 1e-06
    %v518 = vadd.f32 %v486, 1e-06
    %v519 = vrsqrt.pop %v487
    %v520 = vrsqrt.pop %v488
    %v521 = vrsqrt.pop %v489
    %v522 = vrsqrt.pop %v490
    %v523 = vrsqrt.pop %v491
    %v524 = vrsqrt.pop %v492
    %v525 = vrsqrt.pop %v493
    %v526 = vrsqrt.pop %v494
    %v527 = vrsqrt.pop %v495
    %v528 = vrsqrt.pop %v496
    %v529 = vrsqrt.pop %v497
    %v530 = vrsqrt.pop %v498
    %v531 = vrsqrt.pop %v499
    %v532 = vrsqrt.pop %v500
    %v533 = vrsqrt.pop %v501
    %v534 = vrsqrt.pop %v502
    %v535 = vrsqrt.pop %v503
    %v536 = vrsqrt.pop %v504
    %v537 = vrsqrt.pop %v505
    %v538 = vrsqrt.pop %v506
    %v539 = vrsqrt.pop %v507
    %v540 = vrsqrt.pop %v508
    %v541 = vrsqrt.pop %v509
    %v542 = vrsqrt.pop %v510
    %v543 = vrsqrt.pop %v511
    %v544 = vrsqrt.pop %v512
    %v545 = vrsqrt.pop %v513
    %v546 = vrsqrt.pop %v514
    %v547 = vrsqrt.pop %v515
    %v548 = vrsqrt.pop %v516
    %v549 = vrsqrt.pop %v517
    %v550 = vrsqrt.pop %v518
    %v551 = vmul.f32 %v38, %v519
    %v552 = vmul.f32 %v39, %v519
    %v553 = vmul.f32 %v40, %v519
    %v554 = vmul.f32 %v41, %v519
    %v555 = vmul.f32 %v42, %v520
    %v556 = vmul.f32 %v43, %v520
    %v557 = vmul.f32 %v44, %v520
    %v558 = vmul.f32 %v45, %v520
    %v559 = vmul.f32 %v46, %v521
    %v560 = vmul.f32 %v47, %v521
    %v561 = vmul.f32 %v48, %v521
    %v562 = vmul.f32 %v49, %v521
    %v563 = vmul.f32 %v50, %v522
    %v564 = vmul.f32 %v51, %v522
    %v565 = vmul.f32 %v52, %v522
    %v566 = vmul.f32 %v53, %v522
    %v567 = vmul.f32 %v54, %v523
    %v568 = vmul.f32 %v55, %v523
    %v569 = vmul.f32 %v56, %v523
    %v570 = vmul.f32 %v57, %v523
    %v571 = vmul.f32 %v58, %v524
    %v572 = vmul.f32 %v59, %v524
    %v573 = vmul.f32 %v60, %v524
    %v574 = vmul.f32 %v61, %v524
    %v575 = vmul.f32 %v62, %v525
    %v576 = vmul.f32 %v63, %v525
    %v577 = vmul.f32 %v64, %v525
    %v578 = vmul.f32 %v65, %v525
    %v579 = vmul.f32 %v66, %v526
    %v580 = vmul.f32 %v67, %v526
    %v581 = vmul.f32 %v68, %v526
    %v582 = vmul.f32 %v69, %v526
    %v583 = vmul.f32 %v70, %v527
    %v584 = vmul.f32 %v71, %v527
    %v585 = vmul.f32 %v72, %v527
    %v586 = vmul.f32 %v73, %v527
    %v587 = vmul.f32 %v74, %v528
    %v588 = vmul.f32 %v75, %v528
    %v589 = vmul.f32 %v76, %v528
    %v590 = vmul.f32 %v77, %v528
    %v591 = vmul.f32 %v78, %v529
    %v592 = vmul.f32 %v79, %v529
    %v593 = vmul.f32 %v80, %v529
    %v594 = vmul.f32 %v81, %v529
    %v595 = vmul.f32 %v82, %v530
    %v596 = vmul.f32 %v83, %v530
    %v597 = vmul.f32 %v84, %v530
    %v598 = vmul.f32 %v85, %v530
    %v599 = vmul.f32 %v86, %v531
    %v600 = vmul.f32 %v87, %v531
    %v601 = vmul.f32 %v88, %v531
    %v602 = vmul.f32 %v89, %v531
    %v603 = vmul.f32 %v90, %v532
    %v604 = vmul.f32 %v91, %v532
    %v605 = vmul.f32 %v92, %v532
    %v606 = vmul.f32 %v93, %v532
    %v607 = vmul.f32 %v94, %v533
    %v608 = vmul.f32 %v95, %v533
    %v609 = vmul.f32 %v96, %v533
    %v610 = vmul.f32 %v97, %v533
    %v611 = vmul.f32 %v98, %v534
    %v612 = vmul.f32 %v99, %v534
    %v613 = vmul.f32 %v100, %v534
    %v614 = vmul.f32 %v101, %v534
    %v615 = vmul.f32 %v102, %v535
    %v616 = vmul.f32 %v103, %v535
    %v617 = vmul.f32 %v104, %v535
    %v618 = vmul.f32 %v105, %v535
    %v619 = vmul.f32 %v106, %v536
    %v620 = vmul.f32 %v107, %v536
    %v621 = vmul.f32 %v108, %v536
    %v622 = vmul.f32 %v109, %v536
    %v623 = vmul.f32 %v110, %v537
    %v624 = vmul.f32 %v111, %v537
    %v625 = vmul.f32 %v112, %v537
    %v626 = vmul.f32 %v113, %v537
    %v627 = vmul.f32 %v114, %v538
    %v628 = vmul.f32 %v115, %v538
    %v629 = vmul.f32 %v116, %v538
    %v630 = vmul.f32 %v117, %v538
    %v631 = vmul.f32 %v118, %v539
    %v632 = vmul.f32 %v119, %v539
    %v633 = vmul.f32 %v120, %v539
    %v634 = vmul.f32 %v121, %v539
    %v635 = vmul.f32 %v122, %v540
    %v636 = vmul.f32 %v123, %v540
    %v637 = vmul.f32 %v124, %v540
    %v638 = vmul.f32 %v125, %v540
    %v639 = vmul.f32 %v126, %v541
    %v640 = vmul.f32 %v127, %v541
    %v641 = vmul.f32 %v128, %v541
    %v642 = vmul.f32 %v129, %v541
    %v643 = vmul.f32 %v130, %v542
    %v644 = vmul.f32 %v131, %v542
    %v645 = vmul.f32 %v132, %v542
    %v646 = vmul.f32 %v133, %v542
    %v647 = vmul.f32 %v134, %v543
    %v648 = vmul.f32 %v135, %v543
    %v649 = vmul.f32 %v136, %v543
    %v650 = vmul.f32 %v137, %v543
    %v651 = vmul.f32 %v138, %v544
    %v652 = vmul.f32 %v139, %v544
    %v653 = vmul.f32 %v140, %v544
    %v654 = vmul.f32 %v141, %v544
    %v655 = vmul.f32 %v142, %v545
    %v656 = vmul.f32 %v143, %v545
    %v657 = vmul.f32 %v144, %v545
    %v658 = vmul.f32 %v145, %v545
    %v659 = vmul.f32 %v146, %v546
    %v660 = vmul.f32 %v147, %v546
    %v661 = vmul.f32 %v148, %v546
    %v662 = vmul.f32 %v149, %v546
    %v663 = vmul.f32 %v150, %v547
    %v664 = vmul.f32 %v151, %v547
    %v665 = vmul.f32 %v152, %v547
    %v666 = vmul.f32 %v153, %v547
    %v667 = vmul.f32 %v154, %v548
    %v668 = vmul.f32 %v155, %v548
    %v669 = vmul.f32 %v156, %v548
    %v670 = vmul.f32 %v157, %v548
    %v671 = vmul.f32 %v158, %v549
    %v672 = vmul.f32 %v159, %v549
    %v673 = vmul.f32 %v160, %v549
    %v674 = vmul.f32 %v161, %v549
    %v675 = vmul.f32 %v162, %v550
    %v676 = vmul.f32 %v163, %v550
    %v677 = vmul.f32 %v164, %v550
    %v678 = vmul.f32 %v165, %v550
    %v679 = vld [vmem:[#allocation5] sm:$0xf]
    %v681 = vlaneseq
    %v682 = vshrl.u32 %v681, 7
    %v683 = vsub.s32 0, %v682
    %v684 = vrot.slane %v679, %v683
    %v685 = vlaneseq
    %v686 = vshrl.u32 %v685, 7
    %v687 = vsub.s32 1, %v686
    %v688 = vrot.slane %v679, %v687
    %v689 = vlaneseq
    %v690 = vshrl.u32 %v689, 7
    %v691 = vsub.s32 2, %v690
    %v692 = vrot.slane %v679, %v691
    %v693 = vlaneseq
    %v694 = vshrl.u32 %v693, 7
    %v695 = vsub.s32 3, %v694
    %v696 = vrot.slane %v679, %v695
    %v701 = vmul.f32 %v551, %v684
    %v702 = vmul.f32 %v552, %v688
    %v703 = vmul.f32 %v553, %v692
    %v704 = vmul.f32 %v554, %v696
    %v705 = vmul.f32 %v555, %v684
    %v706 = vmul.f32 %v556, %v688
    %v707 = vmul.f32 %v557, %v692
    %v708 = vmul.f32 %v558, %v696
    %v709 = vmul.f32 %v559, %v684
    %v710 = vmul.f32 %v560, %v688
    %v711 = vmul.f32 %v561, %v692
    %v712 = vmul.f32 %v562, %v696
    %v713 = vmul.f32 %v563, %v684
    %v714 = vmul.f32 %v564, %v688
    %v715 = vmul.f32 %v565, %v692
    %v716 = vmul.f32 %v566, %v696
    %v717 = vmul.f32 %v567, %v684
    %v718 = vmul.f32 %v568, %v688
    %v719 = vmul.f32 %v569, %v692
    %v720 = vmul.f32 %v570, %v696
    %v721 = vmul.f32 %v571, %v684
    %v722 = vmul.f32 %v572, %v688
    %v723 = vmul.f32 %v573, %v692
    %v724 = vmul.f32 %v574, %v696
    %v725 = vmul.f32 %v575, %v684
    %v726 = vmul.f32 %v576, %v688
    %v727 = vmul.f32 %v577, %v692
    %v728 = vmul.f32 %v578, %v696
    %v729 = vmul.f32 %v579, %v684
    %v730 = vmul.f32 %v580, %v688
    %v731 = vmul.f32 %v581, %v692
    %v732 = vmul.f32 %v582, %v696
    %v733 = vmul.f32 %v583, %v684
    %v734 = vmul.f32 %v584, %v688
    %v735 = vmul.f32 %v585, %v692
    %v736 = vmul.f32 %v586, %v696
    %v737 = vmul.f32 %v587, %v684
    %v738 = vmul.f32 %v588, %v688
    %v739 = vmul.f32 %v589, %v692
    %v740 = vmul.f32 %v590, %v696
    %v741 = vmul.f32 %v591, %v684
    %v742 = vmul.f32 %v592, %v688
    %v743 = vmul.f32 %v593, %v692
    %v744 = vmul.f32 %v594, %v696
    %v745 = vmul.f32 %v595, %v684
    %v746 = vmul.f32 %v596, %v688
    %v747 = vmul.f32 %v597, %v692
    %v748 = vmul.f32 %v598, %v696
    %v749 = vmul.f32 %v599, %v684
    %v750 = vmul.f32 %v600, %v688
    %v751 = vmul.f32 %v601, %v692
    %v752 = vmul.f32 %v602, %v696
    %v753 = vmul.f32 %v603, %v684
    %v754 = vmul.f32 %v604, %v688
    %v755 = vmul.f32 %v605, %v692
    %v756 = vmul.f32 %v606, %v696
    %v757 = vmul.f32 %v607, %v684
    %v758 = vmul.f32 %v608, %v688
    %v759 = vmul.f32 %v609, %v692
    %v760 = vmul.f32 %v610, %v696
    %v761 = vmul.f32 %v611, %v684
    %v762 = vmul.f32 %v612, %v688
    %v763 = vmul.f32 %v613, %v692
    %v764 = vmul.f32 %v614, %v696
    %v765 = vmul.f32 %v615, %v684
    %v766 = vmul.f32 %v616, %v688
    %v767 = vmul.f32 %v617, %v692
    %v768 = vmul.f32 %v618, %v696
    %v769 = vmul.f32 %v619, %v684
    %v770 = vmul.f32 %v620, %v688
    %v771 = vmul.f32 %v621, %v692
    %v772 = vmul.f32 %v622, %v696
    %v773 = vmul.f32 %v623, %v684
    %v774 = vmul.f32 %v624, %v688
    %v775 = vmul.f32 %v625, %v692
    %v776 = vmul.f32 %v626, %v696
    %v777 = vmul.f32 %v627, %v684
    %v778 = vmul.f32 %v628, %v688
    %v779 = vmul.f32 %v629, %v692
    %v780 = vmul.f32 %v630, %v696
    %v781 = vmul.f32 %v631, %v684
    %v782 = vmul.f32 %v632, %v688
    %v783 = vmul.f32 %v633, %v692
    %v784 = vmul.f32 %v634, %v696
    %v785 = vmul.f32 %v635, %v684
    %v786 = vmul.f32 %v636, %v688
    %v787 = vmul.f32 %v637, %v692
    %v788 = vmul.f32 %v638, %v696
    %v789 = vmul.f32 %v639, %v684
    %v790 = vmul.f32 %v640, %v688
    %v791 = vmul.f32 %v641, %v692
    %v792 = vmul.f32 %v642, %v696
    %v793 = vmul.f32 %v643, %v684
    %v794 = vmul.f32 %v644, %v688
    %v795 = vmul.f32 %v645, %v692
    %v796 = vmul.f32 %v646, %v696
    %v797 = vmul.f32 %v647, %v684
    %v798 = vmul.f32 %v648, %v688
    %v799 = vmul.f32 %v649, %v692
    %v800 = vmul.f32 %v650, %v696
    %v801 = vmul.f32 %v651, %v684
    %v802 = vmul.f32 %v652, %v688
    %v803 = vmul.f32 %v653, %v692
    %v804 = vmul.f32 %v654, %v696
    %v805 = vmul.f32 %v655, %v684
    %v806 = vmul.f32 %v656, %v688
    %v807 = vmul.f32 %v657, %v692
    %v808 = vmul.f32 %v658, %v696
    %v809 = vmul.f32 %v659, %v684
    %v810 = vmul.f32 %v660, %v688
    %v811 = vmul.f32 %v661, %v692
    %v812 = vmul.f32 %v662, %v696
    %v813 = vmul.f32 %v663, %v684
    %v814 = vmul.f32 %v664, %v688
    %v815 = vmul.f32 %v665, %v692
    %v816 = vmul.f32 %v666, %v696
    %v817 = vmul.f32 %v667, %v684
    %v818 = vmul.f32 %v668, %v688
    %v819 = vmul.f32 %v669, %v692
    %v820 = vmul.f32 %v670, %v696
    %v821 = vmul.f32 %v671, %v684
    %v822 = vmul.f32 %v672, %v688
    %v823 = vmul.f32 %v673, %v692
    %v824 = vmul.f32 %v674, %v696
    %v825 = vmul.f32 %v675, %v684
    %v826 = vmul.f32 %v676, %v688
    %v827 = vmul.f32 %v677, %v692
    %v828 = vmul.f32 %v678, %v696
    %829 = vst [vmem:[#allocation7] sm:$0xff] %v701
    %830 = vst [vmem:[#allocation7 + $0x8] sm:$0xff] %v702
    %831 = vst [vmem:[#allocation7 + $0x10] sm:$0xff] %v703
    %832 = vst [vmem:[#allocation7 + $0x18] sm:$0xff] %v704
    %833 = vst [vmem:[#allocation7 + $0x20] sm:$0xff] %v705
    %834 = vst [vmem:[#allocation7 + $0x28] sm:$0xff] %v706
    %835 = vst [vmem:[#allocation7 + $0x30] sm:$0xff] %v707
    %836 = vst [vmem:[#allocation7 + $0x38] sm:$0xff] %v708
    %837 = vst [vmem:[#allocation7 + $0x40] sm:$0xff] %v709
    %838 = vst [vmem:[#allocation7 + $0x48] sm:$0xff] %v710
    %839 = vst [vmem:[#allocation7 + $0x50] sm:$0xff] %v711
    %840 = vst [vmem:[#allocation7 + $0x58] sm:$0xff] %v712
    %841 = vst [vmem:[#allocation7 + $0x60] sm:$0xff] %v713
    %842 = vst [vmem:[#allocation7 + $0x68] sm:$0xff] %v714
    %843 = vst [vmem:[#allocation7 + $0x70] sm:$0xff] %v715
    %844 = vst [vmem:[#allocation7 + $0x78] sm:$0xff] %v716
    %845 = vst [vmem:[#allocation7 + $0x80] sm:$0xff] %v717
    %846 = vst [vmem:[#allocation7 + $0x88] sm:$0xff] %v718
    %847 = vst [vmem:[#allocation7 + $0x90] sm:$0xff] %v719
    %848 = vst [vmem:[#allocation7 + $0x98] sm:$0xff] %v720
    %849 = vst [vmem:[#allocation7 + $0xa0] sm:$0xff] %v721
    %850 = vst [vmem:[#allocation7 + $0xa8] sm:$0xff] %v722
    %851 = vst [vmem:[#allocation7 + $0xb0] sm:$0xff] %v723
    %852 = vst [vmem:[#allocation7 + $0xb8] sm:$0xff] %v724
    %853 = vst [vmem:[#allocation7 + $0xc0] sm:$0xff] %v725
    %854 = vst [vmem:[#allocation7 + $0xc8] sm:$0xff] %v726
    %855 = vst [vmem:[#allocation7 + $0xd0] sm:$0xff] %v727
    %856 = vst [vmem:[#allocation7 + $0xd8] sm:$0xff] %v728
    %857 = vst [vmem:[#allocation7 + $0xe0] sm:$0xff] %v729
    %858 = vst [vmem:[#allocation7 + $0xe8] sm:$0xff] %v730
    %859 = vst [vmem:[#allocation7 + $0xf0] sm:$0xff] %v731
    %860 = vst [vmem:[#allocation7 + $0xf8] sm:$0xff] %v732
    %861 = vst [vmem:[#allocation7 + $0x100] sm:$0xff] %v733
    %862 = vst [vmem:[#allocation7 + $0x108] sm:$0xff] %v734
    %863 = vst [vmem:[#allocation7 + $0x110] sm:$0xff] %v735
    %864 = vst [vmem:[#allocation7 + $0x118] sm:$0xff] %v736
    %865 = vst [vmem:[#allocation7 + $0x120] sm:$0xff] %v737
    %866 = vst [vmem:[#allocation7 + $0x128] sm:$0xff] %v738
    %867 = vst [vmem:[#allocation7 + $0x130] sm:$0xff] %v739
    %868 = vst [vmem:[#allocation7 + $0x138] sm:$0xff] %v740
    %869 = vst [vmem:[#allocation7 + $0x140] sm:$0xff] %v741
    %870 = vst [vmem:[#allocation7 + $0x148] sm:$0xff] %v742
    %871 = vst [vmem:[#allocation7 + $0x150] sm:$0xff] %v743
    %872 = vst [vmem:[#allocation7 + $0x158] sm:$0xff] %v744
    %873 = vst [vmem:[#allocation7 + $0x160] sm:$0xff] %v745
    %874 = vst [vmem:[#allocation7 + $0x168] sm:$0xff] %v746
    %875 = vst [vmem:[#allocation7 + $0x170] sm:$0xff] %v747
    %876 = vst [vmem:[#allocation7 + $0x178] sm:$0xff] %v748
    %877 = vst [vmem:[#allocation7 + $0x180] sm:$0xff] %v749
    %878 = vst [vmem:[#allocation7 + $0x188] sm:$0xff] %v750
    %879 = vst [vmem:[#allocation7 + $0x190] sm:$0xff] %v751
    %880 = vst [vmem:[#allocation7 + $0x198] sm:$0xff] %v752
    %881 = vst [vmem:[#allocation7 + $0x1a0] sm:$0xff] %v753
    %882 = vst [vmem:[#allocation7 + $0x1a8] sm:$0xff] %v754
    %883 = vst [vmem:[#allocation7 + $0x1b0] sm:$0xff] %v755
    %884 = vst [vmem:[#allocation7 + $0x1b8] sm:$0xff] %v756
    %885 = vst [vmem:[#allocation7 + $0x1c0] sm:$0xff] %v757
    %886 = vst [vmem:[#allocation7 + $0x1c8] sm:$0xff] %v758
    %887 = vst [vmem:[#allocation7 + $0x1d0] sm:$0xff] %v759
    %888 = vst [vmem:[#allocation7 + $0x1d8] sm:$0xff] %v760
    %889 = vst [vmem:[#allocation7 + $0x1e0] sm:$0xff] %v761
    %890 = vst [vmem:[#allocation7 + $0x1e8] sm:$0xff] %v762
    %891 = vst [vmem:[#allocation7 + $0x1f0] sm:$0xff] %v763
    %892 = vst [vmem:[#allocation7 + $0x1f8] sm:$0xff] %v764
    %893 = vst [vmem:[#allocation7 + $0x200] sm:$0xff] %v765
    %894 = vst [vmem:[#allocation7 + $0x208] sm:$0xff] %v766
    %895 = vst [vmem:[#allocation7 + $0x210] sm:$0xff] %v767
    %896 = vst [vmem:[#allocation7 + $0x218] sm:$0xff] %v768
    %897 = vst [vmem:[#allocation7 + $0x220] sm:$0xff] %v769
    %898 = vst [vmem:[#allocation7 + $0x228] sm:$0xff] %v770
    %899 = vst [vmem:[#allocation7 + $0x230] sm:$0xff] %v771
    %900 = vst [vmem:[#allocation7 + $0x238] sm:$0xff] %v772
    %901 = vst [vmem:[#allocation7 + $0x240] sm:$0xff] %v773
    %902 = vst [vmem:[#allocation7 + $0x248] sm:$0xff] %v774
    %903 = vst [vmem:[#allocation7 + $0x250] sm:$0xff] %v775
    %904 = vst [vmem:[#allocation7 + $0x258] sm:$0xff] %v776
    %905 = vst [vmem:[#allocation7 + $0x260] sm:$0xff] %v777
    %906 = vst [vmem:[#allocation7 + $0x268] sm:$0xff] %v778
    %907 = vst [vmem:[#allocation7 + $0x270] sm:$0xff] %v779
    %908 = vst [vmem:[#allocation7 + $0x278] sm:$0xff] %v780
    %909 = vst [vmem:[#allocation7 + $0x280] sm:$0xff] %v781
    %910 = vst [vmem:[#allocation7 + $0x288] sm:$0xff] %v782
    %911 = vst [vmem:[#allocation7 + $0x290] sm:$0xff] %v783
    %912 = vst [vmem:[#allocation7 + $0x298] sm:$0xff] %v784
    %913 = vst [vmem:[#allocation7 + $0x2a0] sm:$0xff] %v785
    %914 = vst [vmem:[#allocation7 + $0x2a8] sm:$0xff] %v786
    %915 = vst [vmem:[#allocation7 + $0x2b0] sm:$0xff] %v787
    %916 = vst [vmem:[#allocation7 + $0x2b8] sm:$0xff] %v788
    %917 = vst [vmem:[#allocation7 + $0x2c0] sm:$0xff] %v789
    %918 = vst [vmem:[#allocation7 + $0x2c8] sm:$0xff] %v790
    %919 = vst [vmem:[#allocation7 + $0x2d0] sm:$0xff] %v791
    %920 = vst [vmem:[#allocation7 + $0x2d8] sm:$0xff] %v792
    %921 = vst [vmem:[#allocation7 + $0x2e0] sm:$0xff] %v793
    %922 = vst [vmem:[#allocation7 + $0x2e8] sm:$0xff] %v794
    %923 = vst [vmem:[#allocation7 + $0x2f0] sm:$0xff] %v795
    %924 = vst [vmem:[#allocation7 + $0x2f8] sm:$0xff] %v796
    %925 = vst [vmem:[#allocation7 + $0x300] sm:$0xff] %v797
    %926 = vst [vmem:[#allocation7 + $0x308] sm:$0xff] %v798
    %927 = vst [vmem:[#allocation7 + $0x310] sm:$0xff] %v799
    %928 = vst [vmem:[#allocation7 + $0x318] sm:$0xff] %v800
    %929 = vst [vmem:[#allocation7 + $0x320] sm:$0xff] %v801
    %930 = vst [vmem:[#allocation7 + $0x328] sm:$0xff] %v802
    %931 = vst [vmem:[#allocation7 + $0x330] sm:$0xff] %v803
    %932 = vst [vmem:[#allocation7 + $0x338] sm:$0xff] %v804
    %933 = vst [vmem:[#allocation7 + $0x340] sm:$0xff] %v805
    %934 = vst [vmem:[#allocation7 + $0x348] sm:$0xff] %v806
    %935 = vst [vmem:[#allocation7 + $0x350] sm:$0xff] %v807
    %936 = vst [vmem:[#allocation7 + $0x358] sm:$0xff] %v808
    %937 = vst [vmem:[#allocation7 + $0x360] sm:$0xff] %v809
    %938 = vst [vmem:[#allocation7 + $0x368] sm:$0xff] %v810
    %939 = vst [vmem:[#allocation7 + $0x370] sm:$0xff] %v811
    %940 = vst [vmem:[#allocation7 + $0x378] sm:$0xff] %v812
    %941 = vst [vmem:[#allocation7 + $0x380] sm:$0xff] %v813
    %942 = vst [vmem:[#allocation7 + $0x388] sm:$0xff] %v814
    %943 = vst [vmem:[#allocation7 + $0x390] sm:$0xff] %v815
    %944 = vst [vmem:[#allocation7 + $0x398] sm:$0xff] %v816
    %945 = vst [vmem:[#allocation7 + $0x3a0] sm:$0xff] %v817
    %946 = vst [vmem:[#allocation7 + $0x3a8] sm:$0xff] %v818
    %947 = vst [vmem:[#allocation7 + $0x3b0] sm:$0xff] %v819
    %948 = vst [vmem:[#allocation7 + $0x3b8] sm:$0xff] %v820
    %949 = vst [vmem:[#allocation7 + $0x3c0] sm:$0xff] %v821
    %950 = vst [vmem:[#allocation7 + $0x3c8] sm:$0xff] %v822
    %951 = vst [vmem:[#allocation7 + $0x3d0] sm:$0xff] %v823
    %952 = vst [vmem:[#allocation7 + $0x3d8] sm:$0xff] %v824
    %953 = vst [vmem:[#allocation7 + $0x3e0] sm:$0xff] %v825
    %954 = vst [vmem:[#allocation7 + $0x3e8] sm:$0xff] %v826
    %955 = vst [vmem:[#allocation7 + $0x3f0] sm:$0xff] %v827
    %956 = vst [vmem:[#allocation7 + $0x3f8] sm:$0xff] %v828
    // Predicated region
    $region18: #{tpu_custom_call.1} parent=1 // pred_check
      _
    $region19: #{tpu_custom_call.1} parent=1 // pred_check_branch
      %958 = sbr.rel (0) target = $region21
    $region20: #{tpu_custom_call.1} parent=1 // pred_region
      %s960 = ssub.s32 16384, 16384
      %961 = vsyncadd [#allocation4], %s960
      %s962 = sshll.u32 [#allocation7], 4
      %s963 = int_to_ptr.vmem [resolvable:$true] %s962
      %968 = dma.vmem_to_hbm [thread:$0]  %s963, 16384, %s2, [#allocation4], 512, 512, 32
    $region21: #{tpu_custom_call.1} parent=1 // pred_fallthru
      _
    // Predicated region
    $region22: #{tpu_custom_call.1} parent=1 // pred_check
      _
    $region23: #{tpu_custom_call.1} parent=1 // pred_check_branch
      %970 = sbr.rel (0) target = $region25
    $region24: #{tpu_custom_call.1} parent=1 // pred_region
      %971 = dma.done [#allocation4], 16384
    $region25: #{tpu_custom_call.1} parent=1 // pred_fallthru
      _
    %972 = vsyncpa [#allocation3], 1
    %973 = vsyncpa [#allocation6], 1
    %974 = vsyncpa [#allocation4], 1

</llo_original>
